<compile_context>
chip_gen: v5e
topology: v5e:2x2
jax: 0.10.0
libtpu: 0.0.40
codegen_flags: <defaults>
</compile_context>

<pallas_src>
from functools import partial

import numpy as np
import jax
import jax.numpy as jnp
from jax.experimental import pallas as pl
from jax.experimental.pallas import tpu as pltpu


def _split_sincos_kernel(params_ref, x_ref, o_ref, *, compute_dtype):
    # params_ref: SMEM (5,) f32 = [cos(a), b, tan(a), b*cos(a)-sin(a), sin(a)-cos(a)]
    cosa = params_ref[0]
    b = params_ref[1]
    tga = params_ref[2]
    c1 = params_ref[3]   # b*cos(a) - sin(a)
    c2 = params_ref[4]   # sin(a) - cos(a)
    if compute_dtype != jnp.float32:
        cosa = cosa.astype(compute_dtype)
        b = b.astype(compute_dtype)
        tga = tga.astype(compute_dtype)
        c1 = c1.astype(compute_dtype)
        c2 = c2.astype(compute_dtype)

    # Native-dtype DMA; cast to the compute dtype on the VPU.
    x = x_ref[...]
    if x.dtype != compute_dtype:
        x = x.astype(compute_dtype)

    # Branch order matches the PyTorch masks:
    #   x <= -cos(a)          -> b*x + b*cos(a) - sin(a)
    #   -cos(a) < x < cos(a)  -> x * tan(a)
    #   x >= cos(a)           -> x + sin(a) - cos(a)
    res = jnp.where(
        x <= -cosa,
        b * x + c1,
        jnp.where(x >= cosa, x + c2, x * tga),
    )
    o_ref[...] = res.astype(o_ref.dtype)


def split_sincos_pallas(x, a, b, *,
                        block_bytes=2 * 1024 * 1024,
                        min_grid_steps=8,
                        compute_dtype=jnp.float32):
    """Apply the split_sincos activation elementwise to x (any shape).

    NOTE: `x` should be contiguous; a transposed/strided view forces XLA to
    materialize a copy before the kernel (extra HBM pass on a bandwidth-bound op).
    """
    orig_shape = x.shape
    dtype = x.dtype
    total = int(np.prod(orig_shape)) if orig_shape else 1
    if total == 0:
        return x

    itemsize = jnp.dtype(dtype).itemsize

    # ---- choose a lane count that divides the element count exactly ------
    lanes = None
    for cand in (1024, 512, 256, 128):
        if total % cand == 0:
            lanes = cand
            break
    pad_needed = lanes is None
    if pad_needed:
        lanes = 128  # fallback: tiny tail pad (< 128 elements)

    rows = pl.cdiv(total, lanes)
    padded_total = rows * lanes

    # ---- reshape to a 2-D lane-dense slab (free for contiguous inputs) ---
    x_flat = jnp.ravel(x)
    if pad_needed:
        # Padded zeros fall into the x*tan(a) branch (-> 0) and are sliced off.
        x_flat = jnp.pad(x_flat, (0, padded_total - total))
    x2d = x_flat.reshape(rows, lanes)

    # ---- block sizing -----------------------------------------------------
    # ~block_bytes per buffer (dtype-aware), multiple of 8 rows, and capped so
    # the grid has >= min_grid_steps steps when the input is large enough
    # (feeds both v7x TensorCores).  Partial last block is masked by Pallas.
    if rows <= 8:
        block_rows = rows                      # full-dim block (allowed)
    else:
        budget_rows = max(8, (block_bytes // (lanes * itemsize)) // 8 * 8)
        parallel_cap = max(8, (-(-rows // min_grid_steps)) // 8 * 8)
        block_rows = min(budget_rows, parallel_cap, (rows // 8) * 8)
    num_blocks = pl.cdiv(rows, block_rows)

    # ---- derived scalar parameters (parameter glue, plain JAX) -----------
    a32 = jnp.asarray(a, jnp.float32)
    b32 = jnp.asarray(b, jnp.float32)
    cosa = jnp.cos(a32)
    sina = jnp.sin(a32)
    tga = jnp.tan(a32)
    params = jnp.stack(
        [cosa, b32, tga, b32 * cosa - sina, sina - cosa]
    ).astype(jnp.float32)

    out2d = pl.pallas_call(
        partial(_split_sincos_kernel, compute_dtype=compute_dtype),
        out_shape=jax.ShapeDtypeStruct(x2d.shape, dtype),
        grid_spec=pltpu.PrefetchScalarGridSpec(
            num_scalar_prefetch=1,                       # params -> SMEM once
            grid=(num_blocks,),
            in_specs=[
                pl.BlockSpec((block_rows, lanes), lambda i, params: (i, 0)),
            ],
            out_specs=pl.BlockSpec((block_rows, lanes), lambda i, params: (i, 0)),
        ),
        compiler_params=pltpu.CompilerParams(
            dimension_semantics=("parallel",),
        ),
    )(params, x2d)

    if pad_needed:
        out = out2d.reshape(-1)[:total].reshape(orig_shape)
    else:
        out = out2d.reshape(orig_shape)
    return out


def split_sincos_ref(x, a, b):
    """Pure-JAX reference matching the PyTorch forward."""
    xf = x.astype(jnp.float32)
    cosa = jnp.cos(a)
    sina = jnp.sin(a)
    tga = jnp.tan(a)
    res = jnp.where(
        xf <= -cosa,
        b * xf + b * cosa - sina,
        jnp.where(xf >= cosa, xf + sina - cosa, xf * tga),
    )
    return res.astype(x.dtype)


if __name__ == "__main__":
    key = jax.random.PRNGKey(0)
    k_a, k_b, k_x = jax.random.split(key, 3)

    # Deterministic parameter init mirroring the PyTorch __init__:
    #   a = pi * rand(1) / 2 ,  b = rand(1)
    a = (jnp.pi * jax.random.uniform(k_a, (1,)) / 2.0)[0]
    b = jax.random.uniform(k_b, (1,))[0]

    # Small NCHW input consistent with an activation on conv features.
    x = jax.random.normal(k_x, (2, 4, 16, 16), dtype=jnp.float32)

    out = split_sincos_pallas(x, a, b)
    out = jax.block_until_ready(out)

    ref = split_sincos_ref(x, a, b)
    np.testing.assert_allclose(np.asarray(out), np.asarray(ref),
                               rtol=1e-6, atol=1e-6)

    print("KERNEL_OK")
</pallas_src>

<mosaic_0001>
module attributes {stable_mosaic.version = 11 : i64} {
  func.func @_split_sincos_kernel(%arg0: i32, %arg1: memref<5xf32, #tpu.memory_space<smem>>, %arg2: memref<2x1024xf32, #tpu.memory_space<vmem>>, %arg3: memref<2x1024xf32, #tpu.memory_space<vmem>>) attributes {dimension_semantics = [#tpu.dimension_semantics<parallel>], iteration_bounds = array<i64: 1>, scalar_prefetch = 1 : i64, scratch_operands = 0 : i64, tpu.core_type = #tpu.core_type<tc>, window_params = [{transform_indices = @transform_0, window_bounds = array<i64: 2, 1024>}, {transform_indices = @transform_1, window_bounds = array<i64: 2, 1024>}]} {
    %c0 = arith.constant 0 : index
    %0 = memref.load %arg1[%c0] : memref<5xf32, #tpu.memory_space<smem>>
    %c1 = arith.constant 1 : index
    %1 = memref.load %arg1[%c1] : memref<5xf32, #tpu.memory_space<smem>>
    %c2 = arith.constant 2 : index
    %2 = memref.load %arg1[%c2] : memref<5xf32, #tpu.memory_space<smem>>
    %c3 = arith.constant 3 : index
    %3 = memref.load %arg1[%c3] : memref<5xf32, #tpu.memory_space<smem>>
    %c4 = arith.constant 4 : index
    %4 = memref.load %arg1[%c4] : memref<5xf32, #tpu.memory_space<smem>>
    %c0_0 = arith.constant 0 : index
    %c0_1 = arith.constant 0 : index
    %5 = vector.load %arg2[%c0_0, %c0_1] : memref<2x1024xf32, #tpu.memory_space<vmem>>, vector<2x1024xf32>
    %cst = arith.constant 0.000000e+00 : f32
    %6 = arith.subf %cst, %0 : f32
    %7 = vector.broadcast %6 : f32 to vector<2x1024xf32>
    %8 = arith.cmpf ole, %5, %7 : vector<2x1024xf32>
    %9 = vector.broadcast %1 : f32 to vector<2x1024xf32>
    %10 = arith.mulf %9, %5 : vector<2x1024xf32>
    %11 = vector.broadcast %3 : f32 to vector<2x1024xf32>
    %12 = arith.addf %10, %11 : vector<2x1024xf32>
    %13 = vector.broadcast %0 : f32 to vector<2x1024xf32>
    %14 = arith.cmpf oge, %5, %13 : vector<2x1024xf32>
    %15 = vector.broadcast %4 : f32 to vector<2x1024xf32>
    %16 = arith.addf %5, %15 : vector<2x1024xf32>
    %17 = vector.broadcast %2 : f32 to vector<2x1024xf32>
    %18 = arith.mulf %5, %17 : vector<2x1024xf32>
    %19 = arith.select %14, %16, %18 : vector<2x1024xi1>, vector<2x1024xf32>
    %20 = arith.select %8, %12, %19 : vector<2x1024xi1>, vector<2x1024xf32>
    %c0_2 = arith.constant 0 : index
    %c0_3 = arith.constant 0 : index
    %21 = vector.load %arg3[%c0_2, %c0_3] : memref<2x1024xf32, #tpu.memory_space<vmem>>, vector<2x1024xf32>
    tpu.vector_store %arg3[%c0_2, %c0_3], %20 {strides = array<i32>} : memref<2x1024xf32, #tpu.memory_space<vmem>>, vector<2x1024xf32>,
    return
  }
  func.func @transform_0(%arg0: i32, %arg1: memref<5xf32, #tpu.memory_space<smem>>) -> (i32, i32) {
    %c0_i32 = arith.constant 0 : i32
    %c0_i32_0 = arith.constant 0 : i32
    return %arg0, %c0_i32 : i32, i32
  }
  func.func @transform_1(%arg0: i32, %arg1: memref<5xf32, #tpu.memory_space<smem>>) -> (i32, i32) {
    %c0_i32 = arith.constant 0 : i32
    %c0_i32_0 = arith.constant 0 : i32
    return %arg0, %c0_i32 : i32, i32
  }
}

</mosaic_0001>

<llo_original>
// kernel: tpu_custom_call.1
$region0: #{tpu_custom_call.1}
  #allocation0 [shape = 'u32[]', space=smem, size = 0x4, offset = 0x4, fixed_abs, tag = 'smem constant byte address 0x4 - core index']
  #allocation1 [shape = 'u32[72,128]{1,0:T(1,128)}', space=vmem, size = 0x9000, scoped, tag = 'internal scratch']
  #allocation2 [shape = 's32[1]{0}', space=sflag, size = 0x4, scoped, tag = 'scoped memory for tpu_custom_call.1']
  #allocation3 [shape = 'u8[512]{0}', space=smem, size = 0x200, scoped, tag = 'prefetched SMEM operand 0']
  %s0 = inlined_call_operand.hbm [shape: f32[5], index: 0, kind: input, shape index: {}]
  %s1 = inlined_call_operand.hbm [shape: f32[2,1024], index: 1, kind: input, shape index: {}]
  %s2 = inlined_call_operand.hbm [shape: f32[2,1024], index: 2, kind: output, shape index: {}]
  %s3 = sld [smem:[#allocation0]]
  $region18: #{tpu_custom_call.1} parent=0
    _
  %s5 = ssub.s32 1, %s3
  %s6 = scalar_select 0, %s5, %s3
  %s8 = sshll.u32 %s0, 4
  %s9 = int_to_ptr.hbm [resolvable:$true] %s8
  %11 = dma.hbm_to_smem %s9, 16, [#allocation3], [#allocation2]
  %13 = dma.done [#allocation2], 16
  %14 = sfence
  $region1: #{tpu_custom_call.1} parent=0
    #allocation4 [shape = 'u8[8192]{0}', space=vmem, size = 0x2000, scoped, tag = 'input window, operand 1, single buffered']
    #allocation5 [shape = 's32[1]{0}', space=sflag, size = 0x4, scoped, tag = 'scoped memory for tpu_custom_call.1']
    #allocation6 [shape = 's32[1]{0}', space=sflag, size = 0x4, scoped, tag = 'scoped memory for tpu_custom_call.1']
    #allocation7 [shape = 'u8[8192]{0}', space=vmem, size = 0x2000, scoped, tag = 'output window, operand 0, single buffered']
    %15 = vsyncpa [#allocation5], 0
    %16 = vsyncpa [#allocation6], 0
    // Predicated region
    $region2: #{tpu_custom_call.1} parent=1 // pred_check
      _
    $region3: #{tpu_custom_call.1} parent=1 // pred_check_branch
      %18 = sbr.rel (0) target = $region5
    $region4: #{tpu_custom_call.1} parent=1 // pred_region
      %20 = vsyncadd [#allocation5], 0
      %s22 = sshll.u32 %s1, 4
      %s23 = int_to_ptr.hbm [resolvable:$true] %s22
      %s24 = sshll.u32 [#allocation4], 4
      %s25 = int_to_ptr.vmem [resolvable:$true] %s24
      %27 = dma.hbm_to_vmem [thread:$0]  %s23, 256, %s25, [#allocation5]
    $region5: #{tpu_custom_call.1} parent=1 // pred_fallthru
      _
    // Predicated region
    $region6: #{tpu_custom_call.1} parent=1 // pred_check
      _
    $region7: #{tpu_custom_call.1} parent=1 // pred_check_branch
      %29 = sbr.rel (0) target = $region9
    $region8: #{tpu_custom_call.1} parent=1 // pred_region
      %31 = dma.done [#allocation5], 256
    $region9: #{tpu_custom_call.1} parent=1 // pred_fallthru
      _
    %s32 = sld [smem:[#allocation3]]
    %s33 = sld [smem:[#allocation3 + $0x1]]
    %s34 = sld [smem:[#allocation3 + $0x2]]
    %s35 = sld [smem:[#allocation3 + $0x3]]
    %s36 = sld [smem:[#allocation3 + $0x4]]
    %v37 = vld [vmem:[#allocation4] sm:$0xff]
    %v38 = vld [vmem:[#allocation4 + $0x8] sm:$0xff]
    %s39 = ssub.f32 0.0, %s32
    %v40 = vstv %s39
    %vm41 = vcmp.le.f32.partialorder %v37, %v40
    %vm42 = vcmp.le.f32.partialorder %v38, %v40
    %v43 = vstv %s33
    %v44 = vmul.f32 %v43, %v37
    %v45 = vmul.f32 %v43, %v38
    %v46 = vstv %s35
    %v47 = vadd.f32 %v44, %v46
    %v48 = vadd.f32 %v45, %v46
    %v49 = vstv %s32
    %vm50 = vcmp.ge.f32.partialorder %v37, %v49
    %vm51 = vcmp.ge.f32.partialorder %v38, %v49
    %v52 = vstv %s36
    %v53 = vadd.f32 %v37, %v52
    %v54 = vadd.f32 %v38, %v52
    %v55 = vstv %s34
    %v56 = vmul.f32 %v37, %v55
    %v57 = vmul.f32 %v38, %v55
    %v58 = vsel %vm50, %v53, %v56
    %v59 = vsel %vm51, %v54, %v57
    %v60 = vsel %vm41, %v47, %v58
    %v61 = vsel %vm42, %v48, %v59
    %62 = vst [vmem:[#allocation7] sm:$0xff] %v60
    %63 = vst [vmem:[#allocation7 + $0x8] sm:$0xff] %v61
    // Predicated region
    $region10: #{tpu_custom_call.1} parent=1 // pred_check
      _
    $region11: #{tpu_custom_call.1} parent=1 // pred_check_branch
      %65 = sbr.rel (0) target = $region13
    $region12: #{tpu_custom_call.1} parent=1 // pred_region
      %67 = vsyncadd [#allocation6], 0
      %s69 = sshll.u32 [#allocation7], 4
      %s70 = int_to_ptr.vmem [resolvable:$true] %s69
      %s71 = sshll.u32 %s2, 4
      %s72 = int_to_ptr.hbm [resolvable:$true] %s71
      %74 = dma.vmem_to_hbm [thread:$0]  %s70, 256, %s72, [#allocation6]
    $region13: #{tpu_custom_call.1} parent=1 // pred_fallthru
      _
    // Predicated region
    $region14: #{tpu_custom_call.1} parent=1 // pred_check
      _
    $region15: #{tpu_custom_call.1} parent=1 // pred_check_branch
      %76 = sbr.rel (0) target = $region17
    $region16: #{tpu_custom_call.1} parent=1 // pred_region
      %78 = dma.done [#allocation6], 256
    $region17: #{tpu_custom_call.1} parent=1 // pred_fallthru
      _
    %79 = vsyncpa [#allocation5], 1
    %80 = vsyncpa [#allocation6], 1

</llo_original>
